<compile_context>
chip_gen: v7x
topology: tpu7x:2x2x1
jax: 0.10.0
libtpu: 0.0.40
codegen_flags: <defaults>
</compile_context>

<pallas_src>
import jax
import jax.numpy as jnp
from jax.experimental import pallas as pl
from jax.experimental.pallas import tpu as pltpu


def _visual_model_kernel(x_ref, w1_ref, b1_ref, w2_ref, b2_ref,
                         out_ref, pos_ref):
    """One batch tile: pos = x@w1 + b1 (MXU), out = pos@w2 + b2 (3 VPU FMAs)."""
    x = x_ref[...]                                           # [TILE_B, in_plane]

    # fc_1 on the MXU with f32 accumulation.
    pos = jnp.dot(x, w1_ref[...], preferred_element_type=jnp.float32)
    pos = pos + b1_ref[...].astype(jnp.float32)              # [TILE_B, 3]
    pos_ref[...] = pos.astype(pos_ref.dtype)

    # fc_2: K == 3 is a degenerate MXU shape -> 3 broadcast FMAs on the VPU.
    w2 = w2_ref[...].astype(jnp.float32)                     # [3, in_plane]
    out = b2_ref[...].astype(jnp.float32)                    # [1, in_plane] (broadcast)
    for k in range(w2_ref.shape[0]):                         # unrolled, hidden == 3
        out = out + pos[:, k:k + 1] * w2[k:k + 1, :]
    out_ref[...] = out.astype(out_ref.dtype)                 # [TILE_B, in_plane]


def visual_model_forward(x, w1, b1, w2, b2, *, tile_b=None,
                         vmem_budget_bytes=8 * 1024 * 1024):
    """Forward pass of VisualModel.

    x : [..., in_plane]  (any leading batch dims, like nn.Linear)
    w1: [in_plane, 3],  b1: [1, 3]          (fc_1; transposed vs PyTorch [out, in])
    w2: [3, in_plane],  b2: [1, in_plane]   (fc_2)
    returns (out [..., in_plane], position [..., 3])
    """
    in_plane, hidden = w1.shape
    lead_shape = x.shape[:-1]
    xb = x.reshape(-1, in_plane)
    B = xb.shape[0]

    # --- choose the batch tile (double-buffered x/out/pos must fit the budget) ---
    row_bytes = in_plane * (xb.dtype.itemsize + 4) + hidden * 4
    if tile_b is None:
        tile_b = vmem_budget_bytes // (2 * max(row_bytes, 1))
        tile_b = max(8, min(int(tile_b), 2048))
    tile_b = max(8, (int(tile_b) // 8) * 8)          # sublane (8) alignment
    b_ceil = ((B + 7) // 8) * 8
    tile_b = min(tile_b, b_ceil)                     # no bigger than the batch
    grid = (pl.cdiv(B, tile_b),)

    # Explicit VMEM limit: double-buffered tiles + resident weights + headroom.
    tile_bytes = tile_b * row_bytes
    weight_bytes = sum(a.size * a.dtype.itemsize for a in (w1, b1, w2, b2))
    vmem_limit = int(min(64 * 1024 * 1024,
                         max(16 * 1024 * 1024,
                             2 * tile_bytes + 4 * weight_bytes + (2 << 20))))

    x_spec = pl.BlockSpec((tile_b, in_plane), lambda i: (i, 0))
    w1_spec = pl.BlockSpec((in_plane, hidden), lambda i: (0, 0))   # VMEM-resident
    b1_spec = pl.BlockSpec((1, hidden), lambda i: (0, 0))
    w2_spec = pl.BlockSpec((hidden, in_plane), lambda i: (0, 0))
    b2_spec = pl.BlockSpec((1, in_plane), lambda i: (0, 0))
    out_spec = pl.BlockSpec((tile_b, in_plane), lambda i: (i, 0))
    pos_spec = pl.BlockSpec((tile_b, hidden), lambda i: (i, 0))

    out, pos = pl.pallas_call(
        _visual_model_kernel,
        grid=grid,
        in_specs=[x_spec, w1_spec, b1_spec, w2_spec, b2_spec],
        out_specs=(out_spec, pos_spec),
        out_shape=(
            jax.ShapeDtypeStruct((B, in_plane), jnp.float32),   # out
            jax.ShapeDtypeStruct((B, hidden), jnp.float32),     # position
        ),
        compiler_params=pltpu.CompilerParams(
            dimension_semantics=("parallel",),
            vmem_limit_bytes=vmem_limit,
        ),
    )(xb, w1, b1, w2, b2)

    return (out.reshape(*lead_shape, in_plane),
            pos.reshape(*lead_shape, hidden))


def init_params(key, in_plane):
    """Deterministic init mimicking nn.Linear's uniform(-1/sqrt(fan_in), 1/sqrt(fan_in))."""
    k1, k2, k3, k4 = jax.random.split(key, 4)
    bound1 = 1.0 / jnp.sqrt(jnp.float32(in_plane))
    bound2 = 1.0 / jnp.sqrt(jnp.float32(3))
    # Stored as [in_features, out_features] (transpose of PyTorch's [out, in]).
    w1 = jax.random.uniform(k1, (in_plane, 3), jnp.float32, -bound1, bound1)
    b1 = jax.random.uniform(k2, (1, 3), jnp.float32, -bound1, bound1)
    w2 = jax.random.uniform(k3, (3, in_plane), jnp.float32, -bound2, bound2)
    b2 = jax.random.uniform(k4, (1, in_plane), jnp.float32, -bound2, bound2)
    return w1, b1, w2, b2


def reference_forward(x, w1, b1, w2, b2):
    position = x @ w1 + b1
    out = position @ w2 + b2
    return out, position


if __name__ == "__main__":
    key = jax.random.PRNGKey(0)
    kx, kp = jax.random.split(key)

    B, in_plane = 8, 32
    x = jax.random.normal(kx, (B, in_plane), dtype=jnp.float32)
    w1, b1, w2, b2 = init_params(kp, in_plane)

    out, position = visual_model_forward(x, w1, b1, w2, b2)
    out, position = jax.block_until_ready((out, position))

    out_ref, pos_ref = reference_forward(x, w1, b1, w2, b2)
    assert out.shape == (B, in_plane) and position.shape == (B, 3)
    assert jnp.allclose(position, pos_ref, atol=1e-5, rtol=1e-5)
    assert jnp.allclose(out, out_ref, atol=1e-5, rtol=1e-5)

    print("KERNEL_OK")
</pallas_src>

<mosaic_0001>
module attributes {stable_mosaic.version = 11 : i64} {
  func.func @_visual_model_kernel(%arg0: i32, %arg1: memref<8x32xf32, #tpu.memory_space<vmem>>, %arg2: memref<32x3xf32, #tpu.memory_space<vmem>>, %arg3: memref<1x3xf32, #tpu.memory_space<vmem>>, %arg4: memref<3x32xf32, #tpu.memory_space<vmem>>, %arg5: memref<1x32xf32, #tpu.memory_space<vmem>>, %arg6: memref<8x32xf32, #tpu.memory_space<vmem>>, %arg7: memref<8x3xf32, #tpu.memory_space<vmem>>) attributes {dimension_semantics = [#tpu.dimension_semantics<parallel>], iteration_bounds = array<i64: 1>, scalar_prefetch = 0 : i64, scratch_operands = 0 : i64, tpu.core_type = #tpu.core_type<tc>, window_params = [{transform_indices = @transform_0, window_bounds = array<i64: 8, 32>}, {pipeline_mode = #tpu.pipeline_mode<synchronous>, transform_indices = @transform_1, window_bounds = array<i64: 32, 3>}, {pipeline_mode = #tpu.pipeline_mode<synchronous>, transform_indices = @transform_2, window_bounds = array<i64: 1, 3>}, {pipeline_mode = #tpu.pipeline_mode<synchronous>, transform_indices = @transform_3, window_bounds = array<i64: 3, 32>}, {pipeline_mode = #tpu.pipeline_mode<synchronous>, transform_indices = @transform_4, window_bounds = array<i64: 1, 32>}, {transform_indices = @transform_5, window_bounds = array<i64: 8, 32>}, {transform_indices = @transform_6, window_bounds = array<i64: 8, 3>}]} {
    %c0 = arith.constant 0 : index
    %c0_0 = arith.constant 0 : index
    %0 = vector.load %arg1[%c0, %c0_0] : memref<8x32xf32, #tpu.memory_space<vmem>>, vector<8x32xf32>
    %c0_1 = arith.constant 0 : index
    %c0_2 = arith.constant 0 : index
    %1 = vector.load %arg2[%c0_1, %c0_2] : memref<32x3xf32, #tpu.memory_space<vmem>>, vector<32x3xf32>
    %cst = arith.constant dense<0.000000e+00> : vector<8x3xf32>
    %2 = tpu.matmul %0, %1, %cst {dimension_numbers = #tpu.dot_dimension_numbers<[1], [0], [0], [1], [0, 0, 1, 1], [], []>} : vector<8x32xf32>, vector<32x3xf32>, vector<8x3xf32> -> vector<8x3xf32>
    %c0_3 = arith.constant 0 : index
    %c0_4 = arith.constant 0 : index
    %3 = vector.load %arg3[%c0_3, %c0_4] : memref<1x3xf32, #tpu.memory_space<vmem>>, vector<1x3xf32>
    %4 = vector.broadcast %3 : vector<1x3xf32> to vector<8x3xf32>
    %5 = arith.addf %2, %4 : vector<8x3xf32>
    %c0_5 = arith.constant 0 : index
    %c0_6 = arith.constant 0 : index
    %6 = vector.load %arg7[%c0_5, %c0_6] : memref<8x3xf32, #tpu.memory_space<vmem>>, vector<8x3xf32>
    tpu.vector_store %arg7[%c0_5, %c0_6], %5 {strides = array<i32>} : memref<8x3xf32, #tpu.memory_space<vmem>>, vector<8x3xf32>,
    %c0_7 = arith.constant 0 : index
    %c0_8 = arith.constant 0 : index
    %7 = vector.load %arg4[%c0_7, %c0_8] : memref<3x32xf32, #tpu.memory_space<vmem>>, vector<3x32xf32>
    %c0_9 = arith.constant 0 : index
    %c0_10 = arith.constant 0 : index
    %8 = vector.load %arg5[%c0_9, %c0_10] : memref<1x32xf32, #tpu.memory_space<vmem>>, vector<1x32xf32>
    %9 = vector.extract_strided_slice %5 {offsets = [0, 0], sizes = [8, 1], strides = [1, 1]} : vector<8x3xf32> to vector<8x1xf32>
    %10 = vector.extract_strided_slice %7 {offsets = [0, 0], sizes = [1, 32], strides = [1, 1]} : vector<3x32xf32> to vector<1x32xf32>
    %11 = vector.broadcast %9 : vector<8x1xf32> to vector<8x32xf32>
    %12 = vector.broadcast %10 : vector<1x32xf32> to vector<8x32xf32>
    %13 = arith.mulf %11, %12 : vector<8x32xf32>
    %14 = vector.broadcast %8 : vector<1x32xf32> to vector<8x32xf32>
    %15 = arith.addf %14, %13 : vector<8x32xf32>
    %16 = vector.extract_strided_slice %5 {offsets = [0, 1], sizes = [8, 1], strides = [1, 1]} : vector<8x3xf32> to vector<8x1xf32>
    %17 = vector.extract_strided_slice %7 {offsets = [1, 0], sizes = [1, 32], strides = [1, 1]} : vector<3x32xf32> to vector<1x32xf32>
    %18 = vector.broadcast %16 : vector<8x1xf32> to vector<8x32xf32>
    %19 = vector.broadcast %17 : vector<1x32xf32> to vector<8x32xf32>
    %20 = arith.mulf %18, %19 : vector<8x32xf32>
    %21 = arith.addf %15, %20 : vector<8x32xf32>
    %22 = vector.extract_strided_slice %5 {offsets = [0, 2], sizes = [8, 1], strides = [1, 1]} : vector<8x3xf32> to vector<8x1xf32>
    %23 = vector.extract_strided_slice %7 {offsets = [2, 0], sizes = [1, 32], strides = [1, 1]} : vector<3x32xf32> to vector<1x32xf32>
    %24 = vector.broadcast %22 : vector<8x1xf32> to vector<8x32xf32>
    %25 = vector.broadcast %23 : vector<1x32xf32> to vector<8x32xf32>
    %26 = arith.mulf %24, %25 : vector<8x32xf32>
    %27 = arith.addf %21, %26 : vector<8x32xf32>
    %c0_11 = arith.constant 0 : index
    %c0_12 = arith.constant 0 : index
    %28 = vector.load %arg6[%c0_11, %c0_12] : memref<8x32xf32, #tpu.memory_space<vmem>>, vector<8x32xf32>
    tpu.vector_store %arg6[%c0_11, %c0_12], %27 {strides = array<i32>} : memref<8x32xf32, #tpu.memory_space<vmem>>, vector<8x32xf32>,
    return
  }
  func.func @transform_0(%arg0: i32) -> (i32, i32) {
    %c0_i32 = arith.constant 0 : i32
    %c0_i32_0 = arith.constant 0 : i32
    return %arg0, %c0_i32 : i32, i32
  }
  func.func @transform_1(%arg0: i32) -> (i32, i32) {
    %c0_i32 = arith.constant 0 : i32
    %c0_i32_0 = arith.constant 0 : i32
    %c0_i32_1 = arith.constant 0 : i32
    return %c0_i32, %c0_i32_0 : i32, i32
  }
  func.func @transform_2(%arg0: i32) -> (i32, i32) {
    %c0_i32 = arith.constant 0 : i32
    %c0_i32_0 = arith.constant 0 : i32
    %c0_i32_1 = arith.constant 0 : i32
    return %c0_i32, %c0_i32_0 : i32, i32
  }
  func.func @transform_3(%arg0: i32) -> (i32, i32) {
    %c0_i32 = arith.constant 0 : i32
    %c0_i32_0 = arith.constant 0 : i32
    %c0_i32_1 = arith.constant 0 : i32
    return %c0_i32, %c0_i32_0 : i32, i32
  }
  func.func @transform_4(%arg0: i32) -> (i32, i32) {
    %c0_i32 = arith.constant 0 : i32
    %c0_i32_0 = arith.constant 0 : i32
    %c0_i32_1 = arith.constant 0 : i32
    return %c0_i32, %c0_i32_0 : i32, i32
  }
  func.func @transform_5(%arg0: i32) -> (i32, i32) {
    %c0_i32 = arith.constant 0 : i32
    %c0_i32_0 = arith.constant 0 : i32
    return %arg0, %c0_i32 : i32, i32
  }
  func.func @transform_6(%arg0: i32) -> (i32, i32) {
    %c0_i32 = arith.constant 0 : i32
    %c0_i32_0 = arith.constant 0 : i32
    return %arg0, %c0_i32 : i32, i32
  }
}

</mosaic_0001>

<llo_original>
// kernel: tpu_custom_call.1
$region0: #{tpu_custom_call.1}
  #allocation0 [shape = 'u32[]', space=smem, size = 0x4, offset = 0x4, fixed_abs, tag = 'smem constant byte address 0x4 - core index']
  #allocation1 [shape = 'u32[144,128]{1,0:T(1,128)}', space=vmem, size = 0x12000, scoped, tag = 'internal scratch']
  %s0 = inlined_call_operand.vmem [shape: f32[8,32], index: 0, kind: input, shape index: {}]
  %s1 = inlined_call_operand.vmem [shape: f32[32,3], index: 1, kind: input, shape index: {}]
  %s2 = inlined_call_operand.vmem [shape: f32[1,3], index: 2, kind: input, shape index: {}]
  %s3 = inlined_call_operand.vmem [shape: f32[3,32], index: 3, kind: input, shape index: {}]
  %s4 = inlined_call_operand.vmem [shape: f32[1,32], index: 4, kind: input, shape index: {}]
  %s5 = inlined_call_operand.hbm [shape: f32[8,32], index: 5, kind: output, shape index: {0}]
  %s6 = inlined_call_operand.vmem [shape: f32[8,3], index: 6, kind: output, shape index: {1}]
  %7 = xla_tuple %s5, %s6
  %s8 = sld [smem:[#allocation0]]
  $region38: #{tpu_custom_call.1} parent=0
    _
  %s10 = ssub.s32 1, %s8
  %s11 = scalar_select 0, %s10, %s8
  $region1: #{tpu_custom_call.1} parent=0
    #allocation2 [shape = 'u8[4096]{0}', space=vmem, size = 0x1000, scoped, tag = 'output window, operand 0, single buffered']
    #allocation3 [shape = 's32[1]{0}', space=sflag, size = 0x4, scoped, tag = 'scoped memory for tpu_custom_call.1']
    %12 = vsyncpa [#allocation3], 0
    // Predicated region
    $region2: #{tpu_custom_call.1} parent=1 // pred_check
      _
    $region3: #{tpu_custom_call.1} parent=1 // pred_check_branch
      %14 = sbr.rel (0) target = $region5
    $region4: #{tpu_custom_call.1} parent=1 // pred_region
      _
    $region5: #{tpu_custom_call.1} parent=1 // pred_fallthru
      _
    // Predicated region
    $region6: #{tpu_custom_call.1} parent=1 // pred_check
      _
    $region7: #{tpu_custom_call.1} parent=1 // pred_check_branch
      %16 = sbr.rel (0) target = $region9
    $region8: #{tpu_custom_call.1} parent=1 // pred_region
      _
    $region9: #{tpu_custom_call.1} parent=1 // pred_fallthru
      _
    // Predicated region
    $region10: #{tpu_custom_call.1} parent=1 // pred_check
      _
    $region11: #{tpu_custom_call.1} parent=1 // pred_check_branch
      %18 = sbr.rel (0) target = $region13
    $region12: #{tpu_custom_call.1} parent=1 // pred_region
      _
    $region13: #{tpu_custom_call.1} parent=1 // pred_fallthru
      _
    // Predicated region
    $region14: #{tpu_custom_call.1} parent=1 // pred_check
      _
    $region15: #{tpu_custom_call.1} parent=1 // pred_check_branch
      %20 = sbr.rel (0) target = $region17
    $region16: #{tpu_custom_call.1} parent=1 // pred_region
      _
    $region17: #{tpu_custom_call.1} parent=1 // pred_fallthru
      _
    // Predicated region
    $region18: #{tpu_custom_call.1} parent=1 // pred_check
      _
    $region19: #{tpu_custom_call.1} parent=1 // pred_check_branch
      %22 = sbr.rel (0) target = $region21
    $region20: #{tpu_custom_call.1} parent=1 // pred_region
      _
    $region21: #{tpu_custom_call.1} parent=1 // pred_fallthru
      _
    %v23 = vld [vmem:[%s0] sm:$0xff]
    %v24 = vld [vmem:[%s1] sm:$0xff]
    %v25 = vld [vmem:[%s1 + $0x8] sm:$0xff]
    %v26 = vld [vmem:[%s1 + $0x10] sm:$0xff]
    %v27 = vld [vmem:[%s1 + $0x18] sm:$0xff]
    %v28 = vld [vmem:[%s2] sm:$0x1]
    %v30 = vlaneseq
    %v31 = vshrl.u32 %v30, 7
    %v32 = vsub.s32 0, %v31
    %v33 = vrot.slane %v28, %v32
    %vm35 = vcmask 261120
    %v37 = vsel %vm35, %v23, 0
    %39 = vmatprep.subr.mxu0 0.0
    %40 = vmatpush1.msra.mxu0 %v24
    %41 = vmatprep.subr.mxu0 0.0
    %42 = vmatpush1.msra.mxu0 %v25
    %43 = vmatprep.subr.mxu0 0.0
    %44 = vmatpush1.msra.mxu0 %v26
    %45 = vmatprep.subr.mxu0 0.0
    %46 = vmatpush1.msra.mxu0 %v27
    %47 = vmatprep.subr.mxu0 0.0
    %48 = vmatpush1.msra.mxu0 0.0
    %49 = vmatprep.subr.mxu0 0.0
    %50 = vmatpush1.msra.mxu0 0.0
    %51 = vmatprep.subr.mxu0 0.0
    %52 = vmatpush1.msra.mxu0 0.0
    %53 = vmatprep.subr.mxu0 0.0
    %54 = vmatpush1.msra.mxu0 0.0
    %55 = vmatprep.subr.mxu0 0.0
    %56 = vmatpush1.msra.mxu0 0.0
    %57 = vmatprep.subr.mxu0 0.0
    %58 = vmatpush1.msra.mxu0 0.0
    %59 = vmatprep.subr.mxu0 0.0
    %60 = vmatpush1.msra.mxu0 0.0
    %61 = vmatprep.subr.mxu0 0.0
    %62 = vmatpush1.msra.mxu0 0.0
    %63 = vmatprep.subr.mxu0 0.0
    %64 = vmatpush1.msra.mxu0 0.0
    %65 = vmatprep.subr.mxu0 0.0
    %66 = vmatpush1.msra.mxu0 0.0
    %67 = vmatprep.subr.mxu0 0.0
    %68 = vmatpush1.msra.mxu0 0.0
    %69 = vmatprep.subr.mxu0 0.0
    %70 = vmatpush1.msra.mxu0 0.0
    %71 = vmatprep.subr.mxu0 0.0
    %72 = vmatpush1.msra.mxu0 0.0
    %73 = vmatprep.subr.mxu0 0.0
    %74 = vmatpush1.msra.mxu0 0.0
    %75 = vmatprep.subr.mxu0 0.0
    %76 = vmatpush1.msra.mxu0 0.0
    %77 = vmatprep.subr.mxu0 0.0
    %78 = vmatpush1.msra.mxu0 0.0
    %79 = vmatprep.subr.mxu0 0.0
    %80 = vmatpush1.msra.mxu0 0.0
    %81 = vmatprep.subr.mxu0 0.0
    %82 = vmatpush1.msra.mxu0 0.0
    %83 = vmatprep.subr.mxu0 0.0
    %84 = vmatpush1.msra.mxu0 0.0
    %85 = vmatprep.subr.mxu0 0.0
    %86 = vmatpush1.msra.mxu0 0.0
    %87 = vmatprep.subr.mxu0 0.0
    %88 = vmatpush1.msra.mxu0 0.0
    %89 = vmatprep.subr.mxu0 0.0
    %90 = vmatpush1.msra.mxu0 0.0
    %91 = vmatprep.subr.mxu0 0.0
    %92 = vmatpush1.msra.mxu0 0.0
    %93 = vmatprep.subr.mxu0 0.0
    %94 = vmatpush1.msra.mxu0 0.0
    %95 = vmatprep.subr.mxu0 0.0
    %96 = vmatpush1.msra.mxu0 0.0
    %97 = vmatprep.subr.mxu0 0.0
    %98 = vmatpush1.msra.mxu0 0.0
    %99 = vmatprep.subr.mxu0 0.0
    %100 = vmatpush1.msra.mxu0 0.0
    %101 = vmatprep.subr.mxu0 0.0
    %102 = vmatpush1.msra.mxu0 0.0
    %103 = vmatprep.mubr.f32.mxu0 0.0
    %104 = vmatmul.mubr.f32.gmra.mrb[0].mxu0 %v37
    %v105 = vpop.f32.mrb[0].mxu0
    %v106 = vadd.f32 %v33, %v105
    %v107 = vpop.f32.mrb[0].mxu0
    %108 = vdwg.mxu0
    %vm109 = vcmask 23552
    %110 = vst.msk [vmem:[%s6] sm:$0xff] %vm109, %v106
    %v111 = vld [vmem:[%s3] sm:$0x7]
    %v112 = vld [vmem:[%s4] sm:$0x1]
    %114 = vset.pattern.permute.xlu0 0
    %115 = vperm.xlu0 %114, %v106
    %v116 = vpop.permute.xlu0 %115
    %v118 = vlaneseq
    %v119 = vshrl.u32 %v118, 7
    %v120 = vsub.s32 0, %v119
    %v121 = vrot.slane %v111, %v120
    %v122 = vmul.f32 %v116, %v121
    %v124 = vlaneseq
    %v125 = vshrl.u32 %v124, 7
    %v126 = vsub.s32 0, %v125
    %v127 = vrot.slane %v112, %v126
    %v129 = vadd.f32 %v127, %v122
    %130 = vset.pattern.permute.xlu0 1
    %131 = vperm.xlu0 %130, %v106
    %v132 = vpop.permute.xlu0 %131
    %v134 = vlaneseq
    %v135 = vshrl.u32 %v134, 7
    %v136 = vsub.s32 1, %v135
    %v137 = vrot.slane %v111, %v136
    %v138 = vmul.f32 %v132, %v137
    %v139 = vadd.f32 %v129, %v138
    %140 = vset.pattern.permute.xlu0 2
    %141 = vperm.xlu0 %140, %v106
    %v142 = vpop.permute.xlu0 %141
    %v144 = vlaneseq
    %v145 = vshrl.u32 %v144, 7
    %v146 = vsub.s32 2, %v145
    %v147 = vrot.slane %v111, %v146
    %v148 = vmul.f32 %v142, %v147
    %v149 = vadd.f32 %v139, %v148
    %150 = vst.msk [vmem:[#allocation2] sm:$0xff] %vm35, %v149
    // Predicated region
    $region22: #{tpu_custom_call.1} parent=1 // pred_check
      _
    $region23: #{tpu_custom_call.1} parent=1 // pred_check_branch
      %152 = sbr.rel (0) target = $region25
    $region24: #{tpu_custom_call.1} parent=1 // pred_region
      %s154 = ssub.s32 128, 128
      %155 = vsyncadd [#allocation3], %s154
      %s157 = sshll.u32 [#allocation2], 4
      %s158 = int_to_ptr.vmem [resolvable:$true] %s157
      %160 = dma.vmem_to_hbm [thread:$0]  %s158, 128, %s5, [#allocation3]
    $region25: #{tpu_custom_call.1} parent=1 // pred_fallthru
      _
    // Predicated region
    $region26: #{tpu_custom_call.1} parent=1 // pred_check
      _
    $region27: #{tpu_custom_call.1} parent=1 // pred_check_branch
      %162 = sbr.rel (0) target = $region29
    $region28: #{tpu_custom_call.1} parent=1 // pred_region
      _
    $region29: #{tpu_custom_call.1} parent=1 // pred_fallthru
      _
    // Predicated region
    $region30: #{tpu_custom_call.1} parent=1 // pred_check
      _
    $region31: #{tpu_custom_call.1} parent=1 // pred_check_branch
      %164 = sbr.rel (0) target = $region33
    $region32: #{tpu_custom_call.1} parent=1 // pred_region
      %165 = dma.done [#allocation3], 128
    $region33: #{tpu_custom_call.1} parent=1 // pred_fallthru
      _
    // Predicated region
    $region34: #{tpu_custom_call.1} parent=1 // pred_check
      _
    $region35: #{tpu_custom_call.1} parent=1 // pred_check_branch
      %167 = sbr.rel (0) target = $region37
    $region36: #{tpu_custom_call.1} parent=1 // pred_region
      _
    $region37: #{tpu_custom_call.1} parent=1 // pred_fallthru
      _
    %168 = vsyncpa [#allocation3], 1

</llo_original>
